<compile_context>
chip_gen: v6e
topology: v6e:2x2x1
jax: 0.10.0
libtpu: 0.0.40
codegen_flags: <defaults>
</compile_context>

<pallas_src>
import jax
import jax.numpy as jnp
from jax.experimental import pallas as pl
from jax.experimental.pallas import tpu as pltpu


_TARGET_TILE_BYTES = 4 << 20   # ~4 MiB input tile per grid step (roofline sweet spot)
_LANE = 128


def _round_up(a, b):
    return ((a + b - 1) // b) * b


def _make_lambda_kernel(lambd, out_dtype):
    def kernel(x_ref, o_ref):
        o_ref[...] = lambd(x_ref[...]).astype(out_dtype)
    return kernel


def _pick_lane_width(n):
    """Pick a wide lane dimension; avoid any padding when n is aligned."""
    widths = (8192, 4096, 2048, 1024, 512, 256, 128)
    for w in widths:
        if n >= w and n % w == 0:
            return w, False
    # Unaligned: keep lanes as wide as possible (dense stores); pad < w elems.
    for w in widths:
        if n >= w:
            return w, True
    return _round_up(max(n, 1), _LANE), True


class LambdaLayer:
    """Pallas-backed equivalent of the PyTorch LambdaLayer."""

    def __init__(self, lambd=None):
        self._is_identity = lambd is None
        self.lambd = (lambda t: t) if lambd is None else lambd

    def __call__(self, x):
        # Default LambdaLayer(None) is the identity: skip the kernel entirely.
        if self._is_identity:
            return x

        orig_shape = x.shape
        n = x.size
        if n == 0:
            return self.lambd(x)

        in_dtype = x.dtype
        in_itemsize = jnp.dtype(in_dtype).itemsize

        # ---- lane-dense slab layout ---------------------------------------
        w, needs_pad = _pick_lane_width(n)
        n_pad = _round_up(n, w)
        rows = n_pad // w

        # ---- contract probe: elementwise / shape-preserving -----------------
        # If the lambda is not shape-preserving on the slab view (reduction,
        # permute, reshape, ...) or not jnp-traceable on it, fall back to
        # calling it directly -- identical to nn.Module.forward semantics.
        try:
            out_struct = jax.eval_shape(
                self.lambd, jax.ShapeDtypeStruct((rows, w), in_dtype))
        except Exception:
            return self.lambd(x)
        if out_struct.shape != (rows, w):
            return self.lambd(x)
        out_dtype = out_struct.dtype
        out_itemsize = jnp.dtype(out_dtype).itemsize

        flat = jnp.ravel(x)
        if needs_pad and n_pad != n:
            # NOTE: pad values also go through lambd (harmless for elementwise
            # lambdas; the pad region is sliced off afterwards).
            flat = jnp.pad(flat, (0, n_pad - n))
        slab = flat.reshape(rows, w)

        # ---- row tile: multiple of packed sublane count, ~4 MiB --------------
        pack = max(8, 32 // min(in_itemsize, out_itemsize))
        tm = max(pack, (_TARGET_TILE_BYTES // (w * in_itemsize)) // pack * pack)
        if tm >= rows:
            tm = rows                       # single full-height block (legal)
        else:
            # Prefer >= 4 grid steps so v7x's two TensorCores both get work,
            # but never shrink tiles below ~1 MiB.
            while (tm > pack and pl.cdiv(rows, tm) < 4
                   and tm * w * in_itemsize > (1 << 20)):
                tm = max(pack, _round_up(tm // 2, pack))

        grid = (pl.cdiv(rows, tm),)

        tile_bytes = tm * w * (in_itemsize + out_itemsize)
        vmem_limit = min(48 << 20, max(2 * tile_bytes + (4 << 20), 16 << 20))

        kernel = _make_lambda_kernel(self.lambd, out_dtype)
        out = pl.pallas_call(
            kernel,
            out_shape=jax.ShapeDtypeStruct((rows, w), out_dtype),
            grid=grid,
            in_specs=[pl.BlockSpec((tm, w), lambda i: (i, 0))],
            out_specs=pl.BlockSpec((tm, w), lambda i: (i, 0)),
            compiler_params=pltpu.CompilerParams(
                dimension_semantics=("parallel",),
                vmem_limit_bytes=vmem_limit),
            cost_estimate=pl.CostEstimate(
                flops=n, transcendentals=0,
                bytes_accessed=n * in_itemsize + n * out_itemsize),
        )(slab)

        if needs_pad and n_pad != n:
            return out.reshape(-1)[:n].reshape(orig_shape)
        return out.reshape(orig_shape)


if __name__ == "__main__":
    key = jax.random.PRNGKey(0)
    k0, k1, k2 = jax.random.split(key, 3)

    # Small NCHW input consistent with typical conv-layer usage.
    x = jax.random.normal(k0, (2, 4, 16, 16), dtype=jnp.float32)

    # Default LambdaLayer: lambd=None -> identity (short-circuit, no kernel).
    layer = LambdaLayer(None)
    y = jax.block_until_ready(layer(x))
    assert y.shape == x.shape and y.dtype == x.dtype
    assert jnp.allclose(y, x), "identity lambda mismatch"

    # Non-trivial elementwise lambda applied inside the Pallas kernel
    # (aligned size: 2*4*16*16 = 2048 -> zero-copy slab path).
    layer2 = LambdaLayer(lambda t: t * 2.0 + 1.0)
    y2 = jax.block_until_ready(layer2(x))
    assert jnp.allclose(y2, x * 2.0 + 1.0), "elementwise lambda mismatch"

    # Unaligned-size input exercises the minimal-pad / ragged-tail path.
    x3 = jax.random.normal(k1, (3, 5, 7), dtype=jnp.float32)
    y3 = jax.block_until_ready(layer2(x3))
    assert y3.shape == x3.shape
    assert jnp.allclose(y3, x3 * 2.0 + 1.0), "unaligned lambda mismatch"

    # Dtype-changing elementwise lambda (bf16 -> f32) through the kernel.
    xb = jax.random.normal(k2, (2, 8, 32), dtype=jnp.bfloat16)
    layer3 = LambdaLayer(lambda t: (t * t).astype(jnp.float32))
    y4 = jax.block_until_ready(layer3(xb))
    assert y4.dtype == jnp.float32 and y4.shape == xb.shape
    assert jnp.allclose(y4, (xb * xb).astype(jnp.float32), atol=1e-2, rtol=1e-2), \
        "dtype-changing lambda mismatch"

    # Non-elementwise lambda: falls back to calling the lambda directly
    # (matches nn.Module.forward semantics exactly).
    layer4 = LambdaLayer(lambda t: t.sum())
    y5 = jax.block_until_ready(layer4(x))
    assert jnp.allclose(y5, x.sum(), rtol=1e-5, atol=1e-5), "fallback lambda mismatch"

    print("KERNEL_OK")
</pallas_src>

<mosaic_0001>
module attributes {stable_mosaic.version = 11 : i64} {
  func.func @kernel(%arg0: i32, %arg1: memref<1x2048xf32, #tpu.memory_space<vmem>>, %arg2: memref<1x2048xf32, #tpu.memory_space<vmem>>) attributes {dimension_semantics = [#tpu.dimension_semantics<parallel>], iteration_bounds = array<i64: 1>, scalar_prefetch = 0 : i64, scratch_operands = 0 : i64, tpu.core_type = #tpu.core_type<tc>, window_params = [{transform_indices = @transform_0, window_bounds = array<i64: 1, 2048>}, {transform_indices = @transform_1, window_bounds = array<i64: 1, 2048>}]} {
    %c0 = arith.constant 0 : index
    %c0_0 = arith.constant 0 : index
    %0 = vector.load %arg1[%c0, %c0_0] : memref<1x2048xf32, #tpu.memory_space<vmem>>, vector<1x2048xf32>
    %cst = arith.constant 2.000000e+00 : f32
    %1 = vector.broadcast %cst : f32 to vector<1x2048xf32>
    %2 = arith.mulf %0, %1 : vector<1x2048xf32>
    %cst_1 = arith.constant 1.000000e+00 : f32
    %3 = vector.broadcast %cst_1 : f32 to vector<1x2048xf32>
    %4 = arith.addf %2, %3 : vector<1x2048xf32>
    %c0_2 = arith.constant 0 : index
    %c0_3 = arith.constant 0 : index
    %5 = vector.load %arg2[%c0_2, %c0_3] : memref<1x2048xf32, #tpu.memory_space<vmem>>, vector<1x2048xf32>
    tpu.vector_store %arg2[%c0_2, %c0_3], %4 {strides = array<i32>} : memref<1x2048xf32, #tpu.memory_space<vmem>>, vector<1x2048xf32>,
    return
  }
  func.func @transform_0(%arg0: i32) -> (i32, i32) {
    %c0_i32 = arith.constant 0 : i32
    %c0_i32_0 = arith.constant 0 : i32
    return %arg0, %c0_i32 : i32, i32
  }
  func.func @transform_1(%arg0: i32) -> (i32, i32) {
    %c0_i32 = arith.constant 0 : i32
    %c0_i32_0 = arith.constant 0 : i32
    return %arg0, %c0_i32 : i32, i32
  }
}

</mosaic_0001>

<llo_original>
// kernel: tpu_custom_call.1
$region0: #{tpu_custom_call.1}
  #allocation0 [shape = 'u32[]', space=smem, size = 0x4, offset = 0x4, fixed_abs, tag = 'smem constant byte address 0x4 - core index']
  #allocation1 [shape = 'u32[144,128]{1,0:T(1,128)}', space=vmem, size = 0x12000, scoped, tag = 'internal scratch']
  %s0 = inlined_call_operand.hbm [shape: f32[1,2048], index: 0, kind: input, shape index: {}]
  %s1 = inlined_call_operand.hbm [shape: f32[1,2048], index: 1, kind: output, shape index: {}]
  %s2 = sld [smem:[#allocation0]]
  $region18: #{tpu_custom_call.1} parent=0
    _
  %s4 = ssub.s32 1, %s2
  %s5 = scalar_select 0, %s4, %s2
  $region1: #{tpu_custom_call.1} parent=0
    #allocation2 [shape = 'u8[8192]{0}', space=vmem, size = 0x2000, scoped, tag = 'input window, operand 0, single buffered']
    #allocation3 [shape = 's32[1]{0}', space=sflag, size = 0x4, scoped, tag = 'scoped memory for tpu_custom_call.1']
    #allocation4 [shape = 's32[1]{0}', space=sflag, size = 0x4, scoped, tag = 'scoped memory for tpu_custom_call.1']
    #allocation5 [shape = 'u8[8192]{0}', space=vmem, size = 0x2000, scoped, tag = 'output window, operand 0, single buffered']
    %6 = vsyncpa [#allocation3], 0
    %7 = vsyncpa [#allocation4], 0
    // Predicated region
    $region2: #{tpu_custom_call.1} parent=1 // pred_check
      _
    $region3: #{tpu_custom_call.1} parent=1 // pred_check_branch
      %9 = sbr.rel (0) target = $region5
    $region4: #{tpu_custom_call.1} parent=1 // pred_region
      %s11 = ssub.s32 256, 256
      %12 = vsyncadd [#allocation3], %s11
      %s14 = sshll.u32 [#allocation2], 4
      %s15 = int_to_ptr.vmem [resolvable:$true] %s14
      %17 = dma.hbm_to_vmem [thread:$0]  %s0, 256, %s15, [#allocation3]
    $region5: #{tpu_custom_call.1} parent=1 // pred_fallthru
      _
    // Predicated region
    $region6: #{tpu_custom_call.1} parent=1 // pred_check
      _
    $region7: #{tpu_custom_call.1} parent=1 // pred_check_branch
      %19 = sbr.rel (0) target = $region9
    $region8: #{tpu_custom_call.1} parent=1 // pred_region
      %20 = dma.done [#allocation3], 256
    $region9: #{tpu_custom_call.1} parent=1 // pred_fallthru
      _
    %v21 = vld [vmem:[#allocation2] sm:$0xff]
    %v22 = vld [vmem:[#allocation2 + $0x8] sm:$0xff]
    %v23 = vmul.f32 %v21, 2.0
    %v24 = vmul.f32 %v22, 2.0
    %v25 = vadd.f32 %v23, 1.0
    %v26 = vadd.f32 %v24, 1.0
    %27 = vst [vmem:[#allocation5] sm:$0xff] %v25
    %28 = vst [vmem:[#allocation5 + $0x8] sm:$0xff] %v26
    // Predicated region
    $region10: #{tpu_custom_call.1} parent=1 // pred_check
      _
    $region11: #{tpu_custom_call.1} parent=1 // pred_check_branch
      %30 = sbr.rel (0) target = $region13
    $region12: #{tpu_custom_call.1} parent=1 // pred_region
      %s32 = ssub.s32 256, 256
      %33 = vsyncadd [#allocation4], %s32
      %s35 = sshll.u32 [#allocation5], 4
      %s36 = int_to_ptr.vmem [resolvable:$true] %s35
      %38 = dma.vmem_to_hbm [thread:$0]  %s36, 256, %s1, [#allocation4]
    $region13: #{tpu_custom_call.1} parent=1 // pred_fallthru
      _
    // Predicated region
    $region14: #{tpu_custom_call.1} parent=1 // pred_check
      _
    $region15: #{tpu_custom_call.1} parent=1 // pred_check_branch
      %40 = sbr.rel (0) target = $region17
    $region16: #{tpu_custom_call.1} parent=1 // pred_region
      %41 = dma.done [#allocation4], 256
    $region17: #{tpu_custom_call.1} parent=1 // pred_fallthru
      _
    %42 = vsyncpa [#allocation3], 1
    %43 = vsyncpa [#allocation4], 1

</llo_original>
